<compile_context>
chip_gen: v7x
topology: tpu7x:2x2x1
jax: 0.10.0
libtpu: 0.0.40
codegen_flags: <defaults>
</compile_context>

<pallas_src>
import jax
import jax.numpy as jnp
from jax.experimental import pallas as pl
from jax.experimental.pallas import tpu as pltpu

LANE = 128


def _round_up(x, m):
    return (x + m - 1) // m * m


def dqn_mlp_kernel(x_ref, w1_ref, wr_ref, b_ref, out_ref):
    """Full 6-layer MLP on one (TB, K_pad) batch tile.

    x_ref  : (TB, K_pad)    bf16  flattened image tile
    w1_ref : (K_pad, 128)   bf16  layer-1 weight, out-dim zero-padded to 128
    wr_ref : (5, 128, 128)  bf16  layers 2..6 weights, in/out zero-padded
    b_ref  : (8, 128)       f32   biases, rows 0..5 real (padded to 8 rows)
    out_ref: (TB, 128)      f32   lane-dense padded output, cols 0..2 real
    """
    # Layer 1: the only non-trivial matmul (streams x from HBM).
    t = jnp.dot(x_ref[...], w1_ref[...], preferred_element_type=jnp.float32)
    t = jnp.maximum(t + b_ref[0:1, :], 0.0)

    # Layers 2..5: tiny 128x128 padded matmuls on VMEM-resident weights.
    for j in range(4):
        t = jnp.dot(t.astype(jnp.bfloat16), wr_ref[j],
                    preferred_element_type=jnp.float32)
        t = jnp.maximum(t + b_ref[j + 1:j + 2, :], 0.0)

    # Output layer, no relu. Write the full 128-lane block (unmasked store).
    t = jnp.dot(t.astype(jnp.bfloat16), wr_ref[4],
                preferred_element_type=jnp.float32)
    out_ref[...] = t + b_ref[5:6, :]


def init_dqn_params(key, img_height, img_width, dtype=jnp.float32):
    """Deterministic init mirroring nn.Linear default: U(-1/sqrt(fan_in), +)."""
    dims = [img_height * img_width * 3, 24, 32, 64, 32, 24, 3]
    params = []
    for i in range(6):
        fan_in, fan_out = dims[i], dims[i + 1]
        key, kw, kb = jax.random.split(key, 3)
        bound = 1.0 / (fan_in ** 0.5)
        # stored as (in, out) so the kernel computes x @ W directly
        w = jax.random.uniform(kw, (fan_in, fan_out), dtype, -bound, bound)
        b = jax.random.uniform(kb, (fan_out,), dtype, -bound, bound)
        params.append((w, b))
    return params


def prepare_params(params):
    """Pad/pack the 6 (w, b) pairs into 3 hardware-friendly buffers."""
    w1, b1 = params[0]
    K, o1 = w1.shape
    K_pad = _round_up(K, LANE)

    w1_p = jnp.zeros((K_pad, LANE), jnp.bfloat16)
    w1_p = w1_p.at[:K, :o1].set(w1.astype(jnp.bfloat16))

    biases = jnp.zeros((8, LANE), jnp.float32).at[0, :o1].set(b1)
    wr = []
    for j, (w, b) in enumerate(params[1:]):
        fi, fo = w.shape
        wj = jnp.zeros((LANE, LANE), jnp.bfloat16)
        wr.append(wj.at[:fi, :fo].set(w.astype(jnp.bfloat16)))
        biases = biases.at[j + 1, :fo].set(b)

    return w1_p, jnp.stack(wr), biases


def dqn_forward(x_nchw, params, *, batch_tile=256):
    """x_nchw: (B, 3, H, W) float32, matching the PyTorch NCHW input."""
    B = x_nchw.shape[0]
    x = x_nchw.reshape(B, -1).astype(jnp.bfloat16)  # == torch flatten(start_dim=1)
    K = x.shape[1]
    K_pad = _round_up(K, LANE)

    w1_p, wr_p, b_p = prepare_params(params)
    assert w1_p.shape[0] == K_pad

    # Batch tile: multiple of 8 (sublanes), capped at batch_tile (256 keeps the
    # double-buffered x tile well under the 32 MiB scoped VMEM on every chip,
    # including v7x's 64 MiB physical budget).
    TB = min(batch_tile, _round_up(B, 8))
    B_pad = _round_up(B, TB)
    x_p = jnp.pad(x, ((0, B_pad - B), (0, K_pad - K)))

    out = pl.pallas_call(
        dqn_mlp_kernel,
        out_shape=jax.ShapeDtypeStruct((B_pad, LANE), jnp.float32),
        grid=(B_pad // TB,),
        in_specs=[
            pl.BlockSpec((TB, K_pad), lambda i: (i, 0)),        # streamed per tile
            pl.BlockSpec((K_pad, LANE), lambda i: (0, 0)),      # resident weights
            pl.BlockSpec((5, LANE, LANE), lambda i: (0, 0, 0)), # resident weights
            pl.BlockSpec((8, LANE), lambda i: (0, 0)),          # resident biases
        ],
        out_specs=pl.BlockSpec((TB, LANE), lambda i: (i, 0)),
        compiler_params=pltpu.CompilerParams(
            dimension_semantics=("parallel",),  # megacore sharding on v7x
        ),
    )(x_p, w1_p, wr_p, b_p)

    return out[:B, :3]


def dqn_reference(x_nchw, params):
    """Pure-JAX reference replicating the kernel's bf16-weight / f32-acc math."""
    t = x_nchw.reshape(x_nchw.shape[0], -1)
    t = t.astype(jnp.bfloat16).astype(jnp.float32)
    for i, (w, b) in enumerate(params):
        w = w.astype(jnp.bfloat16).astype(jnp.float32)
        t = t @ w + b
        if i < 5:
            t = jnp.maximum(t, 0.0)
            t = t.astype(jnp.bfloat16).astype(jnp.float32)
    return t


if __name__ == "__main__":
    key = jax.random.PRNGKey(0)
    img_height, img_width = 16, 16

    kx, kp, kx2 = jax.random.split(key, 3)
    params = init_dqn_params(kp, img_height, img_width)

    # Small, spec-consistent case (B=2): padded to one 8-row tile internally.
    x = jax.random.normal(kx, (2, 3, img_height, img_width), jnp.float32)
    out = jax.block_until_ready(dqn_forward(x, params))
    ref = dqn_reference(x, params)
    assert out.shape == (2, 3), out.shape
    assert jnp.allclose(out, ref, atol=5e-3, rtol=5e-3), (out, ref)

    # Larger batch exercising the multi-step batch grid + tail padding.
    x_big = jax.random.normal(kx2, (300, 3, img_height, img_width), jnp.float32)
    out_big = jax.block_until_ready(dqn_forward(x_big, params, batch_tile=128))
    ref_big = dqn_reference(x_big, params)
    assert out_big.shape == (300, 3), out_big.shape
    assert jnp.allclose(out_big, ref_big, atol=5e-3, rtol=5e-3)

    print("KERNEL_OK")
</pallas_src>

<mosaic_0001>
module attributes {stable_mosaic.version = 11 : i64} {
  func.func @dqn_mlp_kernel(%arg0: i32, %arg1: memref<8x768xbf16, #tpu.memory_space<vmem>>, %arg2: memref<768x128xbf16, #tpu.memory_space<vmem>>, %arg3: memref<5x128x128xbf16, #tpu.memory_space<vmem>>, %arg4: memref<8x128xf32, #tpu.memory_space<vmem>>, %arg5: memref<8x128xf32, #tpu.memory_space<vmem>>) attributes {dimension_semantics = [#tpu.dimension_semantics<parallel>], iteration_bounds = array<i64: 1>, scalar_prefetch = 0 : i64, scratch_operands = 0 : i64, tpu.core_type = #tpu.core_type<tc>, window_params = [{transform_indices = @transform_0, window_bounds = array<i64: 8, 768>}, {pipeline_mode = #tpu.pipeline_mode<synchronous>, transform_indices = @transform_1, window_bounds = array<i64: 768, 128>}, {pipeline_mode = #tpu.pipeline_mode<synchronous>, transform_indices = @transform_2, window_bounds = array<i64: 5, 128, 128>}, {pipeline_mode = #tpu.pipeline_mode<synchronous>, transform_indices = @transform_3, window_bounds = array<i64: 8, 128>}, {transform_indices = @transform_4, window_bounds = array<i64: 8, 128>}]} {
    %c0 = arith.constant 0 : index
    %c0_0 = arith.constant 0 : index
    %0 = vector.load %arg1[%c0, %c0_0] : memref<8x768xbf16, #tpu.memory_space<vmem>>, vector<8x768xbf16>
    %c0_1 = arith.constant 0 : index
    %c0_2 = arith.constant 0 : index
    %1 = vector.load %arg2[%c0_1, %c0_2] : memref<768x128xbf16, #tpu.memory_space<vmem>>, vector<768x128xbf16>
    %cst = arith.constant dense<0.000000e+00> : vector<8x128xf32>
    %2 = tpu.matmul %0, %1, %cst {dimension_numbers = #tpu.dot_dimension_numbers<[1], [0], [0], [1], [0, 0, 1, 1], [], []>} : vector<8x768xbf16>, vector<768x128xbf16>, vector<8x128xf32> -> vector<8x128xf32>
    %c0_3 = arith.constant 0 : index
    %c0_4 = arith.constant 0 : index
    %3 = vector.load %arg4[%c0_3, %c0_4] : memref<8x128xf32, #tpu.memory_space<vmem>>, vector<1x128xf32>
    %4 = vector.broadcast %3 : vector<1x128xf32> to vector<8x128xf32>
    %5 = arith.addf %2, %4 : vector<8x128xf32>
    %cst_5 = arith.constant 0.000000e+00 : f32
    %6 = vector.broadcast %cst_5 : f32 to vector<8x128xf32>
    %7 = arith.maximumf %5, %6 : vector<8x128xf32>
    %8 = arith.truncf %7 : vector<8x128xf32> to vector<8x128xbf16>
    %c0_6 = arith.constant 0 : index
    %c0_7 = arith.constant 0 : index
    %c0_8 = arith.constant 0 : index
    %9 = vector.load %arg3[%c0_6, %c0_7, %c0_8] : memref<5x128x128xbf16, #tpu.memory_space<vmem>>, vector<1x128x128xbf16>
    %10 = vector.shape_cast %9 : vector<1x128x128xbf16> to vector<128x128xbf16>
    %cst_9 = arith.constant dense<0.000000e+00> : vector<8x128xf32>
    %11 = tpu.matmul %8, %10, %cst_9 {dimension_numbers = #tpu.dot_dimension_numbers<[1], [0], [0], [1], [0, 0, 1, 1], [], []>} : vector<8x128xbf16>, vector<128x128xbf16>, vector<8x128xf32> -> vector<8x128xf32>
    %c1 = arith.constant 1 : index
    %c0_10 = arith.constant 0 : index
    %12 = vector.load %arg4[%c1, %c0_10] : memref<8x128xf32, #tpu.memory_space<vmem>>, vector<1x128xf32>
    %13 = vector.broadcast %12 : vector<1x128xf32> to vector<8x128xf32>
    %14 = arith.addf %11, %13 : vector<8x128xf32>
    %cst_11 = arith.constant 0.000000e+00 : f32
    %15 = vector.broadcast %cst_11 : f32 to vector<8x128xf32>
    %16 = arith.maximumf %14, %15 : vector<8x128xf32>
    %17 = arith.truncf %16 : vector<8x128xf32> to vector<8x128xbf16>
    %c1_12 = arith.constant 1 : index
    %c0_13 = arith.constant 0 : index
    %c0_14 = arith.constant 0 : index
    %18 = vector.load %arg3[%c1_12, %c0_13, %c0_14] : memref<5x128x128xbf16, #tpu.memory_space<vmem>>, vector<1x128x128xbf16>
    %19 = vector.shape_cast %18 : vector<1x128x128xbf16> to vector<128x128xbf16>
    %cst_15 = arith.constant dense<0.000000e+00> : vector<8x128xf32>
    %20 = tpu.matmul %17, %19, %cst_15 {dimension_numbers = #tpu.dot_dimension_numbers<[1], [0], [0], [1], [0, 0, 1, 1], [], []>} : vector<8x128xbf16>, vector<128x128xbf16>, vector<8x128xf32> -> vector<8x128xf32>
    %c2 = arith.constant 2 : index
    %c0_16 = arith.constant 0 : index
    %21 = vector.load %arg4[%c2, %c0_16] : memref<8x128xf32, #tpu.memory_space<vmem>>, vector<1x128xf32>
    %22 = vector.broadcast %21 : vector<1x128xf32> to vector<8x128xf32>
    %23 = arith.addf %20, %22 : vector<8x128xf32>
    %cst_17 = arith.constant 0.000000e+00 : f32
    %24 = vector.broadcast %cst_17 : f32 to vector<8x128xf32>
    %25 = arith.maximumf %23, %24 : vector<8x128xf32>
    %26 = arith.truncf %25 : vector<8x128xf32> to vector<8x128xbf16>
    %c2_18 = arith.constant 2 : index
    %c0_19 = arith.constant 0 : index
    %c0_20 = arith.constant 0 : index
    %27 = vector.load %arg3[%c2_18, %c0_19, %c0_20] : memref<5x128x128xbf16, #tpu.memory_space<vmem>>, vector<1x128x128xbf16>
    %28 = vector.shape_cast %27 : vector<1x128x128xbf16> to vector<128x128xbf16>
    %cst_21 = arith.constant dense<0.000000e+00> : vector<8x128xf32>
    %29 = tpu.matmul %26, %28, %cst_21 {dimension_numbers = #tpu.dot_dimension_numbers<[1], [0], [0], [1], [0, 0, 1, 1], [], []>} : vector<8x128xbf16>, vector<128x128xbf16>, vector<8x128xf32> -> vector<8x128xf32>
    %c3 = arith.constant 3 : index
    %c0_22 = arith.constant 0 : index
    %30 = vector.load %arg4[%c3, %c0_22] : memref<8x128xf32, #tpu.memory_space<vmem>>, vector<1x128xf32>
    %31 = vector.broadcast %30 : vector<1x128xf32> to vector<8x128xf32>
    %32 = arith.addf %29, %31 : vector<8x128xf32>
    %cst_23 = arith.constant 0.000000e+00 : f32
    %33 = vector.broadcast %cst_23 : f32 to vector<8x128xf32>
    %34 = arith.maximumf %32, %33 : vector<8x128xf32>
    %35 = arith.truncf %34 : vector<8x128xf32> to vector<8x128xbf16>
    %c3_24 = arith.constant 3 : index
    %c0_25 = arith.constant 0 : index
    %c0_26 = arith.constant 0 : index
    %36 = vector.load %arg3[%c3_24, %c0_25, %c0_26] : memref<5x128x128xbf16, #tpu.memory_space<vmem>>, vector<1x128x128xbf16>
    %37 = vector.shape_cast %36 : vector<1x128x128xbf16> to vector<128x128xbf16>
    %cst_27 = arith.constant dense<0.000000e+00> : vector<8x128xf32>
    %38 = tpu.matmul %35, %37, %cst_27 {dimension_numbers = #tpu.dot_dimension_numbers<[1], [0], [0], [1], [0, 0, 1, 1], [], []>} : vector<8x128xbf16>, vector<128x128xbf16>, vector<8x128xf32> -> vector<8x128xf32>
    %c4 = arith.constant 4 : index
    %c0_28 = arith.constant 0 : index
    %39 = vector.load %arg4[%c4, %c0_28] : memref<8x128xf32, #tpu.memory_space<vmem>>, vector<1x128xf32>
    %40 = vector.broadcast %39 : vector<1x128xf32> to vector<8x128xf32>
    %41 = arith.addf %38, %40 : vector<8x128xf32>
    %cst_29 = arith.constant 0.000000e+00 : f32
    %42 = vector.broadcast %cst_29 : f32 to vector<8x128xf32>
    %43 = arith.maximumf %41, %42 : vector<8x128xf32>
    %44 = arith.truncf %43 : vector<8x128xf32> to vector<8x128xbf16>
    %c4_30 = arith.constant 4 : index
    %c0_31 = arith.constant 0 : index
    %c0_32 = arith.constant 0 : index
    %45 = vector.load %arg3[%c4_30, %c0_31, %c0_32] : memref<5x128x128xbf16, #tpu.memory_space<vmem>>, vector<1x128x128xbf16>
    %46 = vector.shape_cast %45 : vector<1x128x128xbf16> to vector<128x128xbf16>
    %cst_33 = arith.constant dense<0.000000e+00> : vector<8x128xf32>
    %47 = tpu.matmul %44, %46, %cst_33 {dimension_numbers = #tpu.dot_dimension_numbers<[1], [0], [0], [1], [0, 0, 1, 1], [], []>} : vector<8x128xbf16>, vector<128x128xbf16>, vector<8x128xf32> -> vector<8x128xf32>
    %c5 = arith.constant 5 : index
    %c0_34 = arith.constant 0 : index
    %48 = vector.load %arg4[%c5, %c0_34] : memref<8x128xf32, #tpu.memory_space<vmem>>, vector<1x128xf32>
    %49 = vector.broadcast %48 : vector<1x128xf32> to vector<8x128xf32>
    %50 = arith.addf %47, %49 : vector<8x128xf32>
    %c0_35 = arith.constant 0 : index
    %c0_36 = arith.constant 0 : index
    %51 = vector.load %arg5[%c0_35, %c0_36] : memref<8x128xf32, #tpu.memory_space<vmem>>, vector<8x128xf32>
    tpu.vector_store %arg5[%c0_35, %c0_36], %50 {strides = array<i32>} : memref<8x128xf32, #tpu.memory_space<vmem>>, vector<8x128xf32>,
    return
  }
  func.func @transform_0(%arg0: i32) -> (i32, i32) {
    %c0_i32 = arith.constant 0 : i32
    %c0_i32_0 = arith.constant 0 : i32
    return %arg0, %c0_i32 : i32, i32
  }
  func.func @transform_1(%arg0: i32) -> (i32, i32) {
    %c0_i32 = arith.constant 0 : i32
    %c0_i32_0 = arith.constant 0 : i32
    %c0_i32_1 = arith.constant 0 : i32
    return %c0_i32, %c0_i32_0 : i32, i32
  }
  func.func @transform_2(%arg0: i32) -> (i32, i32, i32) {
    %c0_i32 = arith.constant 0 : i32
    %c0_i32_0 = arith.constant 0 : i32
    %c0_i32_1 = arith.constant 0 : i32
    %c0_i32_2 = arith.constant 0 : i32
    return %c0_i32, %c0_i32_0, %c0_i32_1 : i32, i32, i32
  }
  func.func @transform_3(%arg0: i32) -> (i32, i32) {
    %c0_i32 = arith.constant 0 : i32
    %c0_i32_0 = arith.constant 0 : i32
    %c0_i32_1 = arith.constant 0 : i32
    return %c0_i32, %c0_i32_0 : i32, i32
  }
  func.func @transform_4(%arg0: i32) -> (i32, i32) {
    %c0_i32 = arith.constant 0 : i32
    %c0_i32_0 = arith.constant 0 : i32
    return %arg0, %c0_i32 : i32, i32
  }
}

</mosaic_0001>

<llo_original>
// kernel: tpu_custom_call.1
$region0: #{tpu_custom_call.1}
  #allocation0 [shape = 'u32[]', space=smem, size = 0x4, offset = 0x4, fixed_abs, tag = 'smem constant byte address 0x4 - core index']
  #allocation1 [shape = 'u32[144,128]{1,0:T(1,128)}', space=vmem, size = 0x12000, scoped, tag = 'internal scratch']
  %s0 = inlined_call_operand.hbm [shape: bf16[8,768], index: 0, kind: input, shape index: {}]
  %s1 = inlined_call_operand.hbm [shape: bf16[768,128], index: 1, kind: input, shape index: {}]
  %s2 = inlined_call_operand.hbm [shape: bf16[5,128,128], index: 2, kind: input, shape index: {}]
  %s3 = inlined_call_operand.vmem [shape: f32[8,128], index: 3, kind: input, shape index: {}]
  %s4 = inlined_call_operand.hbm [shape: f32[8,128], index: 4, kind: output, shape index: {}]
  %s5 = sld [smem:[#allocation0]]
  $region38: #{tpu_custom_call.1} parent=0
    _
  %s7 = ssub.s32 1, %s5
  %s8 = scalar_select 0, %s7, %s5
  $region1: #{tpu_custom_call.1} parent=0
    #allocation2 [shape = 'u8[12288]{0}', space=vmem, size = 0x3000, scoped, tag = 'input window, operand 0, single buffered']
    #allocation3 [shape = 's32[1]{0}', space=sflag, size = 0x4, scoped, tag = 'scoped memory for tpu_custom_call.1']
    #allocation4 [shape = 's32[1]{0}', space=sflag, size = 0x4, scoped, tag = 'scoped memory for tpu_custom_call.1']
    #allocation5 [shape = 'u8[196608]{0}', space=vmem, size = 0x30000, scoped, tag = 'input window, operand 1, single buffered']
    #allocation6 [shape = 's32[1]{0}', space=sflag, size = 0x4, scoped, tag = 'scoped memory for tpu_custom_call.1']
    #allocation7 [shape = 'u8[163840]{0}', space=vmem, size = 0x28000, scoped, tag = 'input window, operand 2, single buffered']
    #allocation8 [shape = 'u8[4096]{0}', space=vmem, size = 0x1000, scoped, tag = 'output window, operand 0, single buffered']
    %9 = vsyncpa [#allocation3], 0
    %10 = vsyncpa [#allocation6], 0
    %11 = vsyncpa [#allocation4], 0
    // Predicated region
    $region2: #{tpu_custom_call.1} parent=1 // pred_check
      _
    $region3: #{tpu_custom_call.1} parent=1 // pred_check_branch
      %13 = sbr.rel (0) target = $region5
    $region4: #{tpu_custom_call.1} parent=1 // pred_region
      %s15 = ssub.s32 384, 384
      %16 = vsyncadd [#allocation3], %s15
      %s18 = sshll.u32 [#allocation2], 4
      %s19 = int_to_ptr.vmem [resolvable:$true] %s18
      %21 = dma.hbm_to_vmem [thread:$0]  %s0, 384, %s19, [#allocation3]
    $region5: #{tpu_custom_call.1} parent=1 // pred_fallthru
      _
    // Predicated region
    $region6: #{tpu_custom_call.1} parent=1 // pred_check
      _
    $region7: #{tpu_custom_call.1} parent=1 // pred_check_branch
      %23 = sbr.rel (0) target = $region9
    $region8: #{tpu_custom_call.1} parent=1 // pred_region
      %s25 = ssub.s32 6144, 6144
      %26 = vsyncadd [#allocation6], %s25
      %s27 = sshll.u32 [#allocation5], 4
      %s28 = int_to_ptr.vmem [resolvable:$true] %s27
      %33 = dma.hbm_to_vmem [thread:$0]  %s1, 6144, %s28, [#allocation6], 64, 64, 4
    $region9: #{tpu_custom_call.1} parent=1 // pred_fallthru
      _
    // Predicated region
    $region10: #{tpu_custom_call.1} parent=1 // pred_check
      _
    $region11: #{tpu_custom_call.1} parent=1 // pred_check_branch
      %35 = sbr.rel (0) target = $region13
    $region12: #{tpu_custom_call.1} parent=1 // pred_region
      %s37 = ssub.s32 5120, 5120
      %38 = vsyncadd [#allocation6], %s37
      %s39 = sshll.u32 [#allocation7], 4
      %s40 = int_to_ptr.vmem [resolvable:$true] %s39
      %45 = dma.hbm_to_vmem [thread:$0]  %s2, 5120, %s40, [#allocation6], 64, 64, 4
    $region13: #{tpu_custom_call.1} parent=1 // pred_fallthru
      _
    // Predicated region
    $region14: #{tpu_custom_call.1} parent=1 // pred_check
      _
    $region15: #{tpu_custom_call.1} parent=1 // pred_check_branch
      %47 = sbr.rel (0) target = $region17
    $region16: #{tpu_custom_call.1} parent=1 // pred_region
      _
    $region17: #{tpu_custom_call.1} parent=1 // pred_fallthru
      _
    // Predicated region
    $region18: #{tpu_custom_call.1} parent=1 // pred_check
      _
    $region19: #{tpu_custom_call.1} parent=1 // pred_check_branch
      %49 = sbr.rel (0) target = $region21
    $region20: #{tpu_custom_call.1} parent=1 // pred_region
      %50 = dma.done [#allocation3], 384
    $region21: #{tpu_custom_call.1} parent=1 // pred_fallthru
      _
    // Predicated region
    $region22: #{tpu_custom_call.1} parent=1 // pred_check
      _
    $region23: #{tpu_custom_call.1} parent=1 // pred_check_branch
      %52 = sbr.rel (0) target = $region25
    $region24: #{tpu_custom_call.1} parent=1 // pred_region
      %53 = dma.done [#allocation6], 6144
    $region25: #{tpu_custom_call.1} parent=1 // pred_fallthru
      _
    // Predicated region
    $region26: #{tpu_custom_call.1} parent=1 // pred_check
      _
    $region27: #{tpu_custom_call.1} parent=1 // pred_check_branch
      %55 = sbr.rel (0) target = $region29
    $region28: #{tpu_custom_call.1} parent=1 // pred_region
      %56 = dma.done [#allocation6], 5120
    $region29: #{tpu_custom_call.1} parent=1 // pred_fallthru
      _
    %v58 = vld [vmem:[#allocation2] sm:$0xff]
    %v59 = vld [vmem:[#allocation2 + $0x8] sm:$0xff]
    %v60 = vld [vmem:[#allocation2 + $0x10] sm:$0xff]
    %v61 = vld [vmem:[#allocation5] sm:$0xf]
    %v62 = vld [vmem:[#allocation5 + $0x4] sm:$0xf]
    %v63 = vld [vmem:[#allocation5 + $0x8] sm:$0xf]
    %v64 = vld [vmem:[#allocation5 + $0xc] sm:$0xf]
    %v65 = vld [vmem:[#allocation5 + $0x10] sm:$0xf]
    %v66 = vld [vmem:[#allocation5 + $0x14] sm:$0xf]
    %v67 = vld [vmem:[#allocation5 + $0x18] sm:$0xf]
    %v68 = vld [vmem:[#allocation5 + $0x1c] sm:$0xf]
    %v69 = vld [vmem:[#allocation5 + $0x20] sm:$0xf]
    %v70 = vld [vmem:[#allocation5 + $0x24] sm:$0xf]
    %v71 = vld [vmem:[#allocation5 + $0x28] sm:$0xf]
    %v72 = vld [vmem:[#allocation5 + $0x2c] sm:$0xf]
    %v73 = vld [vmem:[#allocation5 + $0x30] sm:$0xf]
    %v74 = vld [vmem:[#allocation5 + $0x34] sm:$0xf]
    %v75 = vld [vmem:[#allocation5 + $0x38] sm:$0xf]
    %v76 = vld [vmem:[#allocation5 + $0x3c] sm:$0xf]
    %v77 = vld [vmem:[#allocation5 + $0x40] sm:$0xf]
    %v78 = vld [vmem:[#allocation5 + $0x44] sm:$0xf]
    %v79 = vld [vmem:[#allocation5 + $0x48] sm:$0xf]
    %v80 = vld [vmem:[#allocation5 + $0x4c] sm:$0xf]
    %v81 = vld [vmem:[#allocation5 + $0x50] sm:$0xf]
    %v82 = vld [vmem:[#allocation5 + $0x54] sm:$0xf]
    %v83 = vld [vmem:[#allocation5 + $0x58] sm:$0xf]
    %v84 = vld [vmem:[#allocation5 + $0x5c] sm:$0xf]
    %v85 = vld [vmem:[#allocation5 + $0x60] sm:$0xf]
    %v86 = vld [vmem:[#allocation5 + $0x64] sm:$0xf]
    %v87 = vld [vmem:[#allocation5 + $0x68] sm:$0xf]
    %v88 = vld [vmem:[#allocation5 + $0x6c] sm:$0xf]
    %v89 = vld [vmem:[#allocation5 + $0x70] sm:$0xf]
    %v90 = vld [vmem:[#allocation5 + $0x74] sm:$0xf]
    %v91 = vld [vmem:[#allocation5 + $0x78] sm:$0xf]
    %v92 = vld [vmem:[#allocation5 + $0x7c] sm:$0xf]
    %v93 = vld [vmem:[#allocation5 + $0x80] sm:$0xf]
    %v94 = vld [vmem:[#allocation5 + $0x84] sm:$0xf]
    %v95 = vld [vmem:[#allocation5 + $0x88] sm:$0xf]
    %v96 = vld [vmem:[#allocation5 + $0x8c] sm:$0xf]
    %v97 = vld [vmem:[#allocation5 + $0x90] sm:$0xf]
    %v98 = vld [vmem:[#allocation5 + $0x94] sm:$0xf]
    %v99 = vld [vmem:[#allocation5 + $0x98] sm:$0xf]
    %v100 = vld [vmem:[#allocation5 + $0x9c] sm:$0xf]
    %v101 = vld [vmem:[#allocation5 + $0xa0] sm:$0xf]
    %v102 = vld [vmem:[#allocation5 + $0xa4] sm:$0xf]
    %v103 = vld [vmem:[#allocation5 + $0xa8] sm:$0xf]
    %v104 = vld [vmem:[#allocation5 + $0xac] sm:$0xf]
    %v105 = vld [vmem:[#allocation5 + $0xb0] sm:$0xf]
    %v106 = vld [vmem:[#allocation5 + $0xb4] sm:$0xf]
    %v107 = vld [vmem:[#allocation5 + $0xb8] sm:$0xf]
    %v108 = vld [vmem:[#allocation5 + $0xbc] sm:$0xf]
    %v109 = vld [vmem:[#allocation5 + $0xc0] sm:$0xf]
    %v110 = vld [vmem:[#allocation5 + $0xc4] sm:$0xf]
    %v111 = vld [vmem:[#allocation5 + $0xc8] sm:$0xf]
    %v112 = vld [vmem:[#allocation5 + $0xcc] sm:$0xf]
    %v113 = vld [vmem:[#allocation5 + $0xd0] sm:$0xf]
    %v114 = vld [vmem:[#allocation5 + $0xd4] sm:$0xf]
    %v115 = vld [vmem:[#allocation5 + $0xd8] sm:$0xf]
    %v116 = vld [vmem:[#allocation5 + $0xdc] sm:$0xf]
    %v117 = vld [vmem:[#allocation5 + $0xe0] sm:$0xf]
    %v118 = vld [vmem:[#allocation5 + $0xe4] sm:$0xf]
    %v119 = vld [vmem:[#allocation5 + $0xe8] sm:$0xf]
    %v120 = vld [vmem:[#allocation5 + $0xec] sm:$0xf]
    %v121 = vld [vmem:[#allocation5 + $0xf0] sm:$0xf]
    %v122 = vld [vmem:[#allocation5 + $0xf4] sm:$0xf]
    %v123 = vld [vmem:[#allocation5 + $0xf8] sm:$0xf]
    %v124 = vld [vmem:[#allocation5 + $0xfc] sm:$0xf]
    %v125 = vld [vmem:[#allocation5 + $0x100] sm:$0xf]
    %v126 = vld [vmem:[#allocation5 + $0x104] sm:$0xf]
    %v127 = vld [vmem:[#allocation5 + $0x108] sm:$0xf]
    %v128 = vld [vmem:[#allocation5 + $0x10c] sm:$0xf]
    %v129 = vld [vmem:[#allocation5 + $0x110] sm:$0xf]
    %v130 = vld [vmem:[#allocation5 + $0x114] sm:$0xf]
    %v131 = vld [vmem:[#allocation5 + $0x118] sm:$0xf]
    %v132 = vld [vmem:[#allocation5 + $0x11c] sm:$0xf]
    %v133 = vld [vmem:[#allocation5 + $0x120] sm:$0xf]
    %v134 = vld [vmem:[#allocation5 + $0x124] sm:$0xf]
    %v135 = vld [vmem:[#allocation5 + $0x128] sm:$0xf]
    %v136 = vld [vmem:[#allocation5 + $0x12c] sm:$0xf]
    %v137 = vld [vmem:[#allocation5 + $0x130] sm:$0xf]
    %v138 = vld [vmem:[#allocation5 + $0x134] sm:$0xf]
    %v139 = vld [vmem:[#allocation5 + $0x138] sm:$0xf]
    %v140 = vld [vmem:[#allocation5 + $0x13c] sm:$0xf]
    %v141 = vld [vmem:[#allocation5 + $0x140] sm:$0xf]
    %v142 = vld [vmem:[#allocation5 + $0x144] sm:$0xf]
    %v143 = vld [vmem:[#allocation5 + $0x148] sm:$0xf]
    %v144 = vld [vmem:[#allocation5 + $0x14c] sm:$0xf]
    %v145 = vld [vmem:[#allocation5 + $0x150] sm:$0xf]
    %v146 = vld [vmem:[#allocation5 + $0x154] sm:$0xf]
    %v147 = vld [vmem:[#allocation5 + $0x158] sm:$0xf]
    %v148 = vld [vmem:[#allocation5 + $0x15c] sm:$0xf]
    %v149 = vld [vmem:[#allocation5 + $0x160] sm:$0xf]
    %v150 = vld [vmem:[#allocation5 + $0x164] sm:$0xf]
    %v151 = vld [vmem:[#allocation5 + $0x168] sm:$0xf]
    %v152 = vld [vmem:[#allocation5 + $0x16c] sm:$0xf]
    %v153 = vld [vmem:[#allocation5 + $0x170] sm:$0xf]
    %v154 = vld [vmem:[#allocation5 + $0x174] sm:$0xf]
    %v155 = vld [vmem:[#allocation5 + $0x178] sm:$0xf]
    %v156 = vld [vmem:[#allocation5 + $0x17c] sm:$0xf]
    %v157 = vld [vmem:[%s3] sm:$0x1]
    %v158 = vlaneseq
    %v159 = vshrl.u32 %v158, 7
    %v160 = vsub.s32 0, %v159
    %v161 = vrot.slane %v157, %v160
    %v165 = vunpack.c.l.b16 %v58
    %v166 = vunpack.c.h.b16 %v58
    %v167 = vunpack.c.l.b16 %v59
    %v168 = vunpack.c.h.b16 %v59
    %v169 = vunpack.c.l.b16 %v60
    %v170 = vunpack.c.h.b16 %v60
    %v171 = vpack.c.b16 %v165, %v165
    %v172 = vpack.c.b16 %v166, %v166
    %v173 = vpack.c.b16 %v167, %v167
    %v174 = vpack.c.b16 %v168, %v168
    %v175 = vpack.c.b16 %v169, %v169
    %v176 = vpack.c.b16 %v170, %v170
    %v279 = vunpack.c.l.b16 %v61
    %v280 = vunpack.c.l.b16 %v62
    %v281 = vunpack.c.l.b16 %v63
    %v282 = vunpack.c.l.b16 %v64
    %v283 = vunpack.c.l.b16 %v65
    %v284 = vunpack.c.l.b16 %v66
    %v285 = vunpack.c.l.b16 %v67
    %v286 = vunpack.c.l.b16 %v68
    %v287 = vunpack.c.l.b16 %v69
    %v288 = vunpack.c.l.b16 %v70
    %v289 = vunpack.c.l.b16 %v71
    %v290 = vunpack.c.l.b16 %v72
    %v291 = vunpack.c.l.b16 %v73
    %v292 = vunpack.c.l.b16 %v74
    %v293 = vunpack.c.l.b16 %v75
    %v294 = vunpack.c.l.b16 %v76
    %v295 = vunpack.c.l.b16 %v77
    %v296 = vunpack.c.l.b16 %v78
    %v297 = vunpack.c.l.b16 %v79
    %v298 = vunpack.c.l.b16 %v80
    %v299 = vunpack.c.l.b16 %v81
    %v300 = vunpack.c.l.b16 %v82
    %v301 = vunpack.c.l.b16 %v83
    %v302 = vunpack.c.l.b16 %v84
    %v303 = vunpack.c.l.b16 %v85
    %v304 = vunpack.c.l.b16 %v86
    %v305 = vunpack.c.l.b16 %v87
    %v306 = vunpack.c.l.b16 %v88
    %v307 = vunpack.c.l.b16 %v89
    %v308 = vunpack.c.l.b16 %v90
    %v309 = vunpack.c.l.b16 %v91
    %v310 = vunpack.c.l.b16 %v92
    %v311 = vunpack.c.l.b16 %v93
    %v312 = vunpack.c.l.b16 %v94
    %v313 = vunpack.c.l.b16 %v95
    %v314 = vunpack.c.l.b16 %v96
    %v315 = vunpack.c.l.b16 %v97
    %v316 = vunpack.c.l.b16 %v98
    %v317 = vunpack.c.l.b16 %v99
    %v318 = vunpack.c.l.b16 %v100
    %v319 = vunpack.c.l.b16 %v101
    %v320 = vunpack.c.l.b16 %v102
    %v321 = vunpack.c.l.b16 %v103
    %v322 = vunpack.c.l.b16 %v104
    %v323 = vunpack.c.l.b16 %v105
    %v324 = vunpack.c.l.b16 %v106
    %v325 = vunpack.c.l.b16 %v107
    %v326 = vunpack.c.l.b16 %v108
    %v327 = vunpack.c.l.b16 %v109
    %v328 = vunpack.c.l.b16 %v110
    %v329 = vunpack.c.l.b16 %v111
    %v330 = vunpack.c.l.b16 %v112
    %v331 = vunpack.c.l.b16 %v113
    %v332 = vunpack.c.l.b16 %v114
    %v333 = vunpack.c.l.b16 %v115
    %v334 = vunpack.c.l.b16 %v116
    %v335 = vunpack.c.l.b16 %v117
    %v336 = vunpack.c.l.b16 %v118
    %v337 = vunpack.c.l.b16 %v119
    %v338 = vunpack.c.l.b16 %v120
    %v339 = vunpack.c.l.b16 %v121
    %v340 = vunpack.c.l.b16 %v122
    %v341 = vunpack.c.l.b16 %v123
    %v342 = vunpack.c.l.b16 %v124
    %v343 = vunpack.c.l.b16 %v125
    %v344 = vunpack.c.l.b16 %v126
    %v345 = vunpack.c.l.b16 %v127
    %v346 = vunpack.c.l.b16 %v128
    %v347 = vunpack.c.l.b16 %v129
    %v348 = vunpack.c.l.b16 %v130
    %v349 = vunpack.c.l.b16 %v131
    %v350 = vunpack.c.l.b16 %v132
    %v351 = vunpack.c.l.b16 %v133
    %v352 = vunpack.c.l.b16 %v134
    %v353 = vunpack.c.l.b16 %v135
    %v354 = vunpack.c.l.b16 %v136
    %v355 = vunpack.c.l.b16 %v137
    %v356 = vunpack.c.l.b16 %v138
    %v357 = vunpack.c.l.b16 %v139
    %v358 = vunpack.c.l.b16 %v140
    %v359 = vunpack.c.l.b16 %v141
    %v360 = vunpack.c.l.b16 %v142
    %v361 = vunpack.c.l.b16 %v143
    %v362 = vunpack.c.l.b16 %v144
    %v363 = vunpack.c.l.b16 %v145
    %v364 = vunpack.c.l.b16 %v146
    %v365 = vunpack.c.l.b16 %v147
    %v366 = vunpack.c.l.b16 %v148
    %v367 = vunpack.c.l.b16 %v149
    %v368 = vunpack.c.l.b16 %v150
    %v369 = vunpack.c.l.b16 %v151
    %v370 = vunpack.c.l.b16 %v152
    %v371 = vunpack.c.l.b16 %v153
    %v372 = vunpack.c.l.b16 %v154
    %v373 = vunpack.c.l.b16 %v155
    %v374 = vunpack.c.l.b16 %v156
    %v375 = vpack.c.b16 %v280, %v279
    %v376 = vpack.c.b16 %v282, %v281
    %v377 = vpack.c.b16 %v284, %v283
    %v378 = vpack.c.b16 %v286, %v285
    %v379 = vpack.c.b16 %v288, %v287
    %v380 = vpack.c.b16 %v290, %v289
    %v381 = vpack.c.b16 %v292, %v291
    %v382 = vpack.c.b16 %v294, %v293
    %v383 = vpack.c.b16 %v296, %v295
    %v384 = vpack.c.b16 %v298, %v297
    %v385 = vpack.c.b16 %v300, %v299
    %v386 = vpack.c.b16 %v302, %v301
    %v387 = vpack.c.b16 %v304, %v303
    %v388 = vpack.c.b16 %v306, %v305
    %v389 = vpack.c.b16 %v308, %v307
    %v390 = vpack.c.b16 %v310, %v309
    %v391 = vpack.c.b16 %v312, %v311
    %v392 = vpack.c.b16 %v314, %v313
    %v393 = vpack.c.b16 %v316, %v315
    %v394 = vpack.c.b16 %v318, %v317
    %v395 = vpack.c.b16 %v320, %v319
    %v396 = vpack.c.b16 %v322, %v321
    %v397 = vpack.c.b16 %v324, %v323
    %v398 = vpack.c.b16 %v326, %v325
    %v399 = vpack.c.b16 %v328, %v327
    %v400 = vpack.c.b16 %v330, %v329
    %v401 = vpack.c.b16 %v332, %v331
    %v402 = vpack.c.b16 %v334, %v333
    %v403 = vpack.c.b16 %v336, %v335
    %v404 = vpack.c.b16 %v338, %v337
    %v405 = vpack.c.b16 %v340, %v339
    %v406 = vpack.c.b16 %v342, %v341
    %v407 = vpack.c.b16 %v344, %v343
    %v408 = vpack.c.b16 %v346, %v345
    %v409 = vpack.c.b16 %v348, %v347
    %v410 = vpack.c.b16 %v350, %v349
    %v411 = vpack.c.b16 %v352, %v351
    %v412 = vpack.c.b16 %v354, %v353
    %v413 = vpack.c.b16 %v356, %v355
    %v414 = vpack.c.b16 %v358, %v357
    %v415 = vpack.c.b16 %v360, %v359
    %v416 = vpack.c.b16 %v362, %v361
    %v417 = vpack.c.b16 %v364, %v363
    %v418 = vpack.c.b16 %v366, %v365
    %v419 = vpack.c.b16 %v368, %v367
    %v420 = vpack.c.b16 %v370, %v369
    %v421 = vpack.c.b16 %v372, %v371
    %v422 = vpack.c.b16 %v374, %v373
    %471 = vmatprep.subr.bf16.mxu0 0
    %472 = vmatpush1.bf16.msra.mxu0 %v375
    %473 = vmatprep.subr.bf16.mxu0 0
    %474 = vmatpush1.bf16.msra.mxu0 %v376
    %475 = vmatprep.subr.bf16.mxu0 0
    %476 = vmatpush1.bf16.msra.mxu0 %v377
    %477 = vmatprep.subr.bf16.mxu0 0
    %478 = vmatpush1.bf16.msra.mxu0 %v378
    %479 = vmatprep.subr.bf16.mxu0 0
    %480 = vmatpush1.bf16.msra.mxu0 %v379
    %481 = vmatprep.subr.bf16.mxu0 0
    %482 = vmatpush1.bf16.msra.mxu0 %v380
    %483 = vmatprep.subr.bf16.mxu0 0
    %484 = vmatpush1.bf16.msra.mxu0 %v381
    %485 = vmatprep.subr.bf16.mxu0 0
    %486 = vmatpush1.bf16.msra.mxu0 %v382
    %487 = vmatprep.subr.bf16.mxu0 0
    %488 = vmatpush1.bf16.msra.mxu0 %v383
    %489 = vmatprep.subr.bf16.mxu0 0
    %490 = vmatpush1.bf16.msra.mxu0 %v384
    %491 = vmatprep.subr.bf16.mxu0 0
    %492 = vmatpush1.bf16.msra.mxu0 %v385
    %493 = vmatprep.subr.bf16.mxu0 0
    %494 = vmatpush1.bf16.msra.mxu0 %v386
    %495 = vmatprep.subr.bf16.mxu0 0
    %496 = vmatpush1.bf16.msra.mxu0 %v387
    %497 = vmatprep.subr.bf16.mxu0 0
    %498 = vmatpush1.bf16.msra.mxu0 %v388
    %499 = vmatprep.subr.bf16.mxu0 0
    %500 = vmatpush1.bf16.msra.mxu0 %v389
    %501 = vmatprep.subr.bf16.mxu0 0
    %502 = vmatpush1.bf16.msra.mxu0 %v390
    %503 = vmatprep.mubr.bf16.mxu0 %v172
    %504 = vmatmul.mubr.bf16.gmra.mrb[0].mxu0 %v171
    %v505 = vpop.f32.mrb[0].mxu0
    %v506 = vadd.f32 %v161, %v505
    %v507 = vpop.f32.mrb[0].mxu0
    %v508 = vpop.f32.mrb[0].mxu0
    %v509 = vpop.f32.mrb[0].mxu0
    %510 = vdwg.mxu0
    %511 = vmatprep.subr.bf16.mxu0 0
    %512 = vmatpush1.bf16.msra.mxu0 %v391
    %513 = vmatprep.subr.bf16.mxu0 0
    %514 = vmatpush1.bf16.msra.mxu0 %v392
    %515 = vmatprep.subr.bf16.mxu0 0
    %516 = vmatpush1.bf16.msra.mxu0 %v393
    %517 = vmatprep.subr.bf16.mxu0 0
    %518 = vmatpush1.bf16.msra.mxu0 %v394
    %519 = vmatprep.subr.bf16.mxu0 0
    %520 = vmatpush1.bf16.msra.mxu0 %v395
    %521 = vmatprep.subr.bf16.mxu0 0
    %522 = vmatpush1.bf16.msra.mxu0 %v396
    %523 = vmatprep.subr.bf16.mxu0 0
    %524 = vmatpush1.bf16.msra.mxu0 %v397
    %525 = vmatprep.subr.bf16.mxu0 0
    %526 = vmatpush1.bf16.msra.mxu0 %v398
    %527 = vmatprep.subr.bf16.mxu0 0
    %528 = vmatpush1.bf16.msra.mxu0 %v399
    %529 = vmatprep.subr.bf16.mxu0 0
    %530 = vmatpush1.bf16.msra.mxu0 %v400
    %531 = vmatprep.subr.bf16.mxu0 0
    %532 = vmatpush1.bf16.msra.mxu0 %v401
    %533 = vmatprep.subr.bf16.mxu0 0
    %534 = vmatpush1.bf16.msra.mxu0 %v402
    %535 = vmatprep.subr.bf16.mxu0 0
    %536 = vmatpush1.bf16.msra.mxu0 %v403
    %537 = vmatprep.subr.bf16.mxu0 0
    %538 = vmatpush1.bf16.msra.mxu0 %v404
    %539 = vmatprep.subr.bf16.mxu0 0
    %540 = vmatpush1.bf16.msra.mxu0 %v405
    %541 = vmatprep.subr.bf16.mxu0 0
    %542 = vmatpush1.bf16.msra.mxu0 %v406
    %543 = vmatprep.mubr.bf16.mxu0 %v174
    %544 = vmatmul.mubr.bf16.gmra.mrb[0].mxu0 %v173
    %v545 = vpop.f32.mrb[0].mxu0
    %v546 = vadd.f32 %v506, %v545
    %v547 = vpop.f32.mrb[0].mxu0
    %v548 = vpop.f32.mrb[0].mxu0
    %v549 = vpop.f32.mrb[0].mxu0
    %550 = vdwg.mxu0
    %551 = vmatprep.subr.bf16.mxu0 0
    %552 = vmatpush1.bf16.msra.mxu0 %v407
    %553 = vmatprep.subr.bf16.mxu0 0
    %554 = vmatpush1.bf16.msra.mxu0 %v408
    %555 = vmatprep.subr.bf16.mxu0 0
    %556 = vmatpush1.bf16.msra.mxu0 %v409
    %557 = vmatprep.subr.bf16.mxu0 0
    %558 = vmatpush1.bf16.msra.mxu0 %v410
    %559 = vmatprep.subr.bf16.mxu0 0
    %560 = vmatpush1.bf16.msra.mxu0 %v411
    %561 = vmatprep.subr.bf16.mxu0 0
    %562 = vmatpush1.bf16.msra.mxu0 %v412
    %563 = vmatprep.subr.bf16.mxu0 0
    %564 = vmatpush1.bf16.msra.mxu0 %v413
    %565 = vmatprep.subr.bf16.mxu0 0
    %566 = vmatpush1.bf16.msra.mxu0 %v414
    %567 = vmatprep.subr.bf16.mxu0 0
    %568 = vmatpush1.bf16.msra.mxu0 %v415
    %569 = vmatprep.subr.bf16.mxu0 0
    %570 = vmatpush1.bf16.msra.mxu0 %v416
    %571 = vmatprep.subr.bf16.mxu0 0
    %572 = vmatpush1.bf16.msra.mxu0 %v417
    %573 = vmatprep.subr.bf16.mxu0 0
    %574 = vmatpush1.bf16.msra.mxu0 %v418
    %575 = vmatprep.subr.bf16.mxu0 0
    %576 = vmatpush1.bf16.msra.mxu0 %v419
    %577 = vmatprep.subr.bf16.mxu0 0
    %578 = vmatpush1.bf16.msra.mxu0 %v420
    %579 = vmatprep.subr.bf16.mxu0 0
    %580 = vmatpush1.bf16.msra.mxu0 %v421
    %581 = vmatprep.subr.bf16.mxu0 0
    %582 = vmatpush1.bf16.msra.mxu0 %v422
    %583 = vmatprep.mubr.bf16.mxu0 %v176
    %584 = vmatmul.mubr.bf16.gmra.mrb[0].mxu0 %v175
    %v585 = vpop.f32.mrb[0].mxu0
    %v586 = vadd.f32 %v546, %v585
    %v587 = vpop.f32.mrb[0].mxu0
    %v588 = vpop.f32.mrb[0].mxu0
    %v589 = vpop.f32.mrb[0].mxu0
    %590 = vdwg.mxu0
    %v591 = vmax.f32 %v586, 0.0
    %v592 = vpack.c.bf16 %v591, %v591
    %v593 = vld [vmem:[#allocation7] sm:$0xf]
    %v594 = vld [vmem:[#allocation7 + $0x4] sm:$0xf]
    %v595 = vld [vmem:[#allocation7 + $0x8] sm:$0xf]
    %v596 = vld [vmem:[#allocation7 + $0xc] sm:$0xf]
    %v597 = vld [vmem:[#allocation7 + $0x10] sm:$0xf]
    %v598 = vld [vmem:[#allocation7 + $0x14] sm:$0xf]
    %v599 = vld [vmem:[#allocation7 + $0x18] sm:$0xf]
    %v600 = vld [vmem:[#allocation7 + $0x1c] sm:$0xf]
    %v601 = vld [vmem:[#allocation7 + $0x20] sm:$0xf]
    %v602 = vld [vmem:[#allocation7 + $0x24] sm:$0xf]
    %v603 = vld [vmem:[#allocation7 + $0x28] sm:$0xf]
    %v604 = vld [vmem:[#allocation7 + $0x2c] sm:$0xf]
    %v605 = vld [vmem:[#allocation7 + $0x30] sm:$0xf]
    %v606 = vld [vmem:[#allocation7 + $0x34] sm:$0xf]
    %v607 = vld [vmem:[#allocation7 + $0x38] sm:$0xf]
    %v608 = vld [vmem:[#allocation7 + $0x3c] sm:$0xf]
    %v609 = vld [vmem:[%s3 + $0x1] sm:$0x1]
    %v610 = vlaneseq
    %v611 = vshrl.u32 %v610, 7
    %v612 = vsub.s32 0, %v611
    %v613 = vrot.slane %v609, %v612
    %v630 = vunpack.c.l.b16 %v593
    %v631 = vunpack.c.l.b16 %v594
    %v632 = vunpack.c.l.b16 %v595
    %v633 = vunpack.c.l.b16 %v596
    %v634 = vunpack.c.l.b16 %v597
    %v635 = vunpack.c.l.b16 %v598
    %v636 = vunpack.c.l.b16 %v599
    %v637 = vunpack.c.l.b16 %v600
    %v638 = vunpack.c.l.b16 %v601
    %v639 = vunpack.c.l.b16 %v602
    %v640 = vunpack.c.l.b16 %v603
    %v641 = vunpack.c.l.b16 %v604
    %v642 = vunpack.c.l.b16 %v605
    %v643 = vunpack.c.l.b16 %v606
    %v644 = vunpack.c.l.b16 %v607
    %v645 = vunpack.c.l.b16 %v608
    %v646 = vpack.c.b16 %v631, %v630
    %v647 = vpack.c.b16 %v633, %v632
    %v648 = vpack.c.b16 %v635, %v634
    %v649 = vpack.c.b16 %v637, %v636
    %v650 = vpack.c.b16 %v639, %v638
    %v651 = vpack.c.b16 %v641, %v640
    %v652 = vpack.c.b16 %v643, %v642
    %v653 = vpack.c.b16 %v645, %v644
    %662 = vmatprep.subr.bf16.mxu0 0
    %663 = vmatpush1.bf16.msra.mxu0 %v646
    %664 = vmatprep.subr.bf16.mxu0 0
    %665 = vmatpush1.bf16.msra.mxu0 %v647
    %666 = vmatprep.subr.bf16.mxu0 0
    %667 = vmatpush1.bf16.msra.mxu0 %v648
    %668 = vmatprep.subr.bf16.mxu0 0
    %669 = vmatpush1.bf16.msra.mxu0 %v649
    %670 = vmatprep.subr.bf16.mxu0 0
    %671 = vmatpush1.bf16.msra.mxu0 %v650
    %672 = vmatprep.subr.bf16.mxu0 0
    %673 = vmatpush1.bf16.msra.mxu0 %v651
    %674 = vmatprep.subr.bf16.mxu0 0
    %675 = vmatpush1.bf16.msra.mxu0 %v652
    %676 = vmatprep.subr.bf16.mxu0 0
    %677 = vmatpush1.bf16.msra.mxu0 %v653
    %678 = vmatprep.subr.bf16.mxu0 0
    %679 = vmatpush1.bf16.msra.mxu0 0
    %680 = vmatprep.subr.bf16.mxu0 0
    %681 = vmatpush1.bf16.msra.mxu0 0
    %682 = vmatprep.subr.bf16.mxu0 0
    %683 = vmatpush1.bf16.msra.mxu0 0
    %684 = vmatprep.subr.bf16.mxu0 0
    %685 = vmatpush1.bf16.msra.mxu0 0
    %686 = vmatprep.subr.bf16.mxu0 0
    %687 = vmatpush1.bf16.msra.mxu0 0
    %688 = vmatprep.subr.bf16.mxu0 0
    %689 = vmatpush1.bf16.msra.mxu0 0
    %690 = vmatprep.subr.bf16.mxu0 0
    %691 = vmatpush1.bf16.msra.mxu0 0
    %692 = vmatprep.subr.bf16.mxu0 0
    %693 = vmatpush1.bf16.msra.mxu0 0
    %694 = vmatprep.mubr.bf16.mxu0 0
    %695 = vmatmul.mubr.bf16.gmra.mrb[0].mxu0 %v592
    %v696 = vpop.f32.mrb[0].mxu0
    %v697 = vadd.f32 %v613, %v696
    %v698 = vpop.f32.mrb[0].mxu0
    %v699 = vpop.f32.mrb[0].mxu0
    %v700 = vpop.f32.mrb[0].mxu0
    %701 = vdwg.mxu0
    %v702 = vmax.f32 %v697, 0.0
    %v703 = vpack.c.bf16 %v702, %v702
    %s704 = scalar_lea.vmem [#allocation7], 64
    %v705 = vld [vmem:[%s704] sm:$0xf]
    %v706 = vld [vmem:[%s704 + $0x4] sm:$0xf]
    %v707 = vld [vmem:[%s704 + $0x8] sm:$0xf]
    %v708 = vld [vmem:[%s704 + $0xc] sm:$0xf]
    %v709 = vld [vmem:[%s704 + $0x10] sm:$0xf]
    %v710 = vld [vmem:[%s704 + $0x14] sm:$0xf]
    %v711 = vld [vmem:[%s704 + $0x18] sm:$0xf]
    %v712 = vld [vmem:[%s704 + $0x1c] sm:$0xf]
    %v713 = vld [vmem:[%s704 + $0x20] sm:$0xf]
    %v714 = vld [vmem:[%s704 + $0x24] sm:$0xf]
    %v715 = vld [vmem:[%s704 + $0x28] sm:$0xf]
    %v716 = vld [vmem:[%s704 + $0x2c] sm:$0xf]
    %v717 = vld [vmem:[%s704 + $0x30] sm:$0xf]
    %v718 = vld [vmem:[%s704 + $0x34] sm:$0xf]
    %v719 = vld [vmem:[%s704 + $0x38] sm:$0xf]
    %v720 = vld [vmem:[%s704 + $0x3c] sm:$0xf]
    %v721 = vld [vmem:[%s3 + $0x2] sm:$0x1]
    %v722 = vlaneseq
    %v723 = vshrl.u32 %v722, 7
    %v724 = vsub.s32 0, %v723
    %v725 = vrot.slane %v721, %v724
    %v742 = vunpack.c.l.b16 %v705
    %v743 = vunpack.c.l.b16 %v706
    %v744 = vunpack.c.l.b16 %v707
    %v745 = vunpack.c.l.b16 %v708
    %v746 = vunpack.c.l.b16 %v709
    %v747 = vunpack.c.l.b16 %v710
    %v748 = vunpack.c.l.b16 %v711
    %v749 = vunpack.c.l.b16 %v712
    %v750 = vunpack.c.l.b16 %v713
    %v751 = vunpack.c.l.b16 %v714
    %v752 = vunpack.c.l.b16 %v715
    %v753 = vunpack.c.l.b16 %v716
    %v754 = vunpack.c.l.b16 %v717
    %v755 = vunpack.c.l.b16 %v718
    %v756 = vunpack.c.l.b16 %v719
    %v757 = vunpack.c.l.b16 %v720
    %v758 = vpack.c.b16 %v743, %v742
    %v759 = vpack.c.b16 %v745, %v744
    %v760 = vpack.c.b16 %v747, %v746
    %v761 = vpack.c.b16 %v749, %v748
    %v762 = vpack.c.b16 %v751, %v750
    %v763 = vpack.c.b16 %v753, %v752
    %v764 = vpack.c.b16 %v755, %v754
    %v765 = vpack.c.b16 %v757, %v756
    %774 = vmatprep.subr.bf16.mxu0 0
    %775 = vmatpush1.bf16.msra.mxu0 %v758
    %776 = vmatprep.subr.bf16.mxu0 0
    %777 = vmatpush1.bf16.msra.mxu0 %v759
    %778 = vmatprep.subr.bf16.mxu0 0
    %779 = vmatpush1.bf16.msra.mxu0 %v760
    %780 = vmatprep.subr.bf16.mxu0 0
    %781 = vmatpush1.bf16.msra.mxu0 %v761
    %782 = vmatprep.subr.bf16.mxu0 0
    %783 = vmatpush1.bf16.msra.mxu0 %v762
    %784 = vmatprep.subr.bf16.mxu0 0
    %785 = vmatpush1.bf16.msra.mxu0 %v763
    %786 = vmatprep.subr.bf16.mxu0 0
    %787 = vmatpush1.bf16.msra.mxu0 %v764
    %788 = vmatprep.subr.bf16.mxu0 0
    %789 = vmatpush1.bf16.msra.mxu0 %v765
    %790 = vmatprep.subr.bf16.mxu0 0
    %791 = vmatpush1.bf16.msra.mxu0 0
    %792 = vmatprep.subr.bf16.mxu0 0
    %793 = vmatpush1.bf16.msra.mxu0 0
    %794 = vmatprep.subr.bf16.mxu0 0
    %795 = vmatpush1.bf16.msra.mxu0 0
    %796 = vmatprep.subr.bf16.mxu0 0
    %797 = vmatpush1.bf16.msra.mxu0 0
    %798 = vmatprep.subr.bf16.mxu0 0
    %799 = vmatpush1.bf16.msra.mxu0 0
    %800 = vmatprep.subr.bf16.mxu0 0
    %801 = vmatpush1.bf16.msra.mxu0 0
    %802 = vmatprep.subr.bf16.mxu0 0
    %803 = vmatpush1.bf16.msra.mxu0 0
    %804 = vmatprep.subr.bf16.mxu0 0
    %805 = vmatpush1.bf16.msra.mxu0 0
    %806 = vmatprep.mubr.bf16.mxu0 0
    %807 = vmatmul.mubr.bf16.gmra.mrb[0].mxu0 %v703
    %v808 = vpop.f32.mrb[0].mxu0
    %v809 = vadd.f32 %v725, %v808
    %v810 = vpop.f32.mrb[0].mxu0
    %v811 = vpop.f32.mrb[0].mxu0
    %v812 = vpop.f32.mrb[0].mxu0
    %813 = vdwg.mxu0
    %v814 = vmax.f32 %v809, 0.0
    %v815 = vpack.c.bf16 %v814, %v814
    %s816 = scalar_lea.vmem [#allocation7], 128
    %v817 = vld [vmem:[%s816] sm:$0xf]
    %v818 = vld [vmem:[%s816 + $0x4] sm:$0xf]
    %v819 = vld [vmem:[%s816 + $0x8] sm:$0xf]
    %v820 = vld [vmem:[%s816 + $0xc] sm:$0xf]
    %v821 = vld [vmem:[%s816 + $0x10] sm:$0xf]
    %v822 = vld [vmem:[%s816 + $0x14] sm:$0xf]
    %v823 = vld [vmem:[%s816 + $0x18] sm:$0xf]
    %v824 = vld [vmem:[%s816 + $0x1c] sm:$0xf]
    %v825 = vld [vmem:[%s816 + $0x20] sm:$0xf]
    %v826 = vld [vmem:[%s816 + $0x24] sm:$0xf]
    %v827 = vld [vmem:[%s816 + $0x28] sm:$0xf]
    %v828 = vld [vmem:[%s816 + $0x2c] sm:$0xf]
    %v829 = vld [vmem:[%s816 + $0x30] sm:$0xf]
    %v830 = vld [vmem:[%s816 + $0x34] sm:$0xf]
    %v831 = vld [vmem:[%s816 + $0x38] sm:$0xf]
    %v832 = vld [vmem:[%s816 + $0x3c] sm:$0xf]
    %v833 = vld [vmem:[%s3 + $0x3] sm:$0x1]
    %v834 = vlaneseq
    %v835 = vshrl.u32 %v834, 7
    %v836 = vsub.s32 0, %v835
    %v837 = vrot.slane %v833, %v836
    %v854 = vunpack.c.l.b16 %v817
    %v855 = vunpack.c.l.b16 %v818
    %v856 = vunpack.c.l.b16 %v819
    %v857 = vunpack.c.l.b16 %v820
    %v858 = vunpack.c.l.b16 %v821
    %v859 = vunpack.c.l.b16 %v822
    %v860 = vunpack.c.l.b16 %v823
    %v861 = vunpack.c.l.b16 %v824
    %v862 = vunpack.c.l.b16 %v825
    %v863 = vunpack.c.l.b16 %v826
    %v864 = vunpack.c.l.b16 %v827
    %v865 = vunpack.c.l.b16 %v828
    %v866 = vunpack.c.l.b16 %v829
    %v867 = vunpack.c.l.b16 %v830
    %v868 = vunpack.c.l.b16 %v831
    %v869 = vunpack.c.l.b16 %v832
    %v870 = vpack.c.b16 %v855, %v854
    %v871 = vpack.c.b16 %v857, %v856
    %v872 = vpack.c.b16 %v859, %v858
    %v873 = vpack.c.b16 %v861, %v860
    %v874 = vpack.c.b16 %v863, %v862
    %v875 = vpack.c.b16 %v865, %v864
    %v876 = vpack.c.b16 %v867, %v866
    %v877 = vpack.c.b16 %v869, %v868
    %886 = vmatprep.subr.bf16.mxu0 0
    %887 = vmatpush1.bf16.msra.mxu0 %v870
    %888 = vmatprep.subr.bf16.mxu0 0
    %889 = vmatpush1.bf16.msra.mxu0 %v871
    %890 = vmatprep.subr.bf16.mxu0 0
    %891 = vmatpush1.bf16.msra.mxu0 %v872
    %892 = vmatprep.subr.bf16.mxu0 0
    %893 = vmatpush1.bf16.msra.mxu0 %v873
    %894 = vmatprep.subr.bf16.mxu0 0
    %895 = vmatpush1.bf16.msra.mxu0 %v874
    %896 = vmatprep.subr.bf16.mxu0 0
    %897 = vmatpush1.bf16.msra.mxu0 %v875
    %898 = vmatprep.subr.bf16.mxu0 0
    %899 = vmatpush1.bf16.msra.mxu0 %v876
    %900 = vmatprep.subr.bf16.mxu0 0
    %901 = vmatpush1.bf16.msra.mxu0 %v877
    %902 = vmatprep.subr.bf16.mxu0 0
    %903 = vmatpush1.bf16.msra.mxu0 0
    %904 = vmatprep.subr.bf16.mxu0 0
    %905 = vmatpush1.bf16.msra.mxu0 0
    %906 = vmatprep.subr.bf16.mxu0 0
    %907 = vmatpush1.bf16.msra.mxu0 0
    %908 = vmatprep.subr.bf16.mxu0 0
    %909 = vmatpush1.bf16.msra.mxu0 0
    %910 = vmatprep.subr.bf16.mxu0 0
    %911 = vmatpush1.bf16.msra.mxu0 0
    %912 = vmatprep.subr.bf16.mxu0 0
    %913 = vmatpush1.bf16.msra.mxu0 0
    %914 = vmatprep.subr.bf16.mxu0 0
    %915 = vmatpush1.bf16.msra.mxu0 0
    %916 = vmatprep.subr.bf16.mxu0 0
    %917 = vmatpush1.bf16.msra.mxu0 0
    %918 = vmatprep.mubr.bf16.mxu0 0
    %919 = vmatmul.mubr.bf16.gmra.mrb[0].mxu0 %v815
    %v920 = vpop.f32.mrb[0].mxu0
    %v921 = vadd.f32 %v837, %v920
    %v922 = vpop.f32.mrb[0].mxu0
    %v923 = vpop.f32.mrb[0].mxu0
    %v924 = vpop.f32.mrb[0].mxu0
    %925 = vdwg.mxu0
    %v926 = vmax.f32 %v921, 0.0
    %v927 = vpack.c.bf16 %v926, %v926
    %s928 = scalar_lea.vmem [#allocation7], 192
    %v929 = vld [vmem:[%s928] sm:$0xf]
    %v930 = vld [vmem:[%s928 + $0x4] sm:$0xf]
    %v931 = vld [vmem:[%s928 + $0x8] sm:$0xf]
    %v932 = vld [vmem:[%s928 + $0xc] sm:$0xf]
    %v933 = vld [vmem:[%s928 + $0x10] sm:$0xf]
    %v934 = vld [vmem:[%s928 + $0x14] sm:$0xf]
    %v935 = vld [vmem:[%s928 + $0x18] sm:$0xf]
    %v936 = vld [vmem:[%s928 + $0x1c] sm:$0xf]
    %v937 = vld [vmem:[%s928 + $0x20] sm:$0xf]
    %v938 = vld [vmem:[%s928 + $0x24] sm:$0xf]
    %v939 = vld [vmem:[%s928 + $0x28] sm:$0xf]
    %v940 = vld [vmem:[%s928 + $0x2c] sm:$0xf]
    %v941 = vld [vmem:[%s928 + $0x30] sm:$0xf]
    %v942 = vld [vmem:[%s928 + $0x34] sm:$0xf]
    %v943 = vld [vmem:[%s928 + $0x38] sm:$0xf]
    %v944 = vld [vmem:[%s928 + $0x3c] sm:$0xf]
    %v945 = vld [vmem:[%s3 + $0x4] sm:$0x1]
    %v946 = vlaneseq
    %v947 = vshrl.u32 %v946, 7
    %v948 = vsub.s32 0, %v947
    %v949 = vrot.slane %v945, %v948
    %v966 = vunpack.c.l.b16 %v929
    %v967 = vunpack.c.l.b16 %v930
    %v968 = vunpack.c.l.b16 %v931
    %v969 = vunpack.c.l.b16 %v932
    %v970 = vunpack.c.l.b16 %v933
    %v971 = vunpack.c.l.b16 %v934
    %v972 = vunpack.c.l.b16 %v935
    %v973 = vunpack.c.l.b16 %v936
    %v974 = vunpack.c.l.b16 %v937
    %v975 = vunpack.c.l.b16 %v938
    %v976 = vunpack.c.l.b16 %v939
    %v977 = vunpack.c.l.b16 %v940
    %v978 = vunpack.c.l.b16 %v941
    %v979 = vunpack.c.l.b16 %v942
    %v980 = vunpack.c.l.b16 %v943
    %v981 = vunpack.c.l.b16 %v944
    %v982 = vpack.c.b16 %v967, %v966
    %v983 = vpack.c.b16 %v969, %v968
    %v984 = vpack.c.b16 %v971, %v970
    %v985 = vpack.c.b16 %v973, %v972
    %v986 = vpack.c.b16 %v975, %v974
    %v987 = vpack.c.b16 %v977, %v976
    %v988 = vpack.c.b16 %v979, %v978
    %v989 = vpack.c.b16 %v981, %v980
    %998 = vmatprep.subr.bf16.mxu0 0
    %999 = vmatpush1.bf16.msra.mxu0 %v982
    %1000 = vmatprep.subr.bf16.mxu0 0
    %1001 = vmatpush1.bf16.msra.mxu0 %v983
    %1002 = vmatprep.subr.bf16.mxu0 0
    %1003 = vmatpush1.bf16.msra.mxu0 %v984
    %1004 = vmatprep.subr.bf16.mxu0 0
    %1005 = vmatpush1.bf16.msra.mxu0 %v985
    %1006 = vmatprep.subr.bf16.mxu0 0
    %1007 = vmatpush1.bf16.msra.mxu0 %v986
    %1008 = vmatprep.subr.bf16.mxu0 0
    %1009 = vmatpush1.bf16.msra.mxu0 %v987
    %1010 = vmatprep.subr.bf16.mxu0 0
    %1011 = vmatpush1.bf16.msra.mxu0 %v988
    %1012 = vmatprep.subr.bf16.mxu0 0
    %1013 = vmatpush1.bf16.msra.mxu0 %v989
    %1014 = vmatprep.subr.bf16.mxu0 0
    %1015 = vmatpush1.bf16.msra.mxu0 0
    %1016 = vmatprep.subr.bf16.mxu0 0
    %1017 = vmatpush1.bf16.msra.mxu0 0
    %1018 = vmatprep.subr.bf16.mxu0 0
    %1019 = vmatpush1.bf16.msra.mxu0 0
    %1020 = vmatprep.subr.bf16.mxu0 0
    %1021 = vmatpush1.bf16.msra.mxu0 0
    %1022 = vmatprep.subr.bf16.mxu0 0
    %1023 = vmatpush1.bf16.msra.mxu0 0
    %1024 = vmatprep.subr.bf16.mxu0 0
    %1025 = vmatpush1.bf16.msra.mxu0 0
    %1026 = vmatprep.subr.bf16.mxu0 0
    %1027 = vmatpush1.bf16.msra.mxu0 0
    %1028 = vmatprep.subr.bf16.mxu0 0
    %1029 = vmatpush1.bf16.msra.mxu0 0
    %1030 = vmatprep.mubr.bf16.mxu0 0
    %1031 = vmatmul.mubr.bf16.gmra.mrb[0].mxu0 %v927
    %v1032 = vpop.f32.mrb[0].mxu0
    %v1033 = vadd.f32 %v949, %v1032
    %v1034 = vpop.f32.mrb[0].mxu0
    %v1035 = vpop.f32.mrb[0].mxu0
    %v1036 = vpop.f32.mrb[0].mxu0
    %1037 = vdwg.mxu0
    %v1038 = vmax.f32 %v1033, 0.0
    %v1039 = vpack.c.bf16 %v1038, %v1038
    %s1040 = scalar_lea.vmem [#allocation7], 256
    %v1041 = vld [vmem:[%s1040] sm:$0xf]
    %v1042 = vld [vmem:[%s1040 + $0x4] sm:$0xf]
    %v1043 = vld [vmem:[%s1040 + $0x8] sm:$0xf]
    %v1044 = vld [vmem:[%s1040 + $0xc] sm:$0xf]
    %v1045 = vld [vmem:[%s1040 + $0x10] sm:$0xf]
    %v1046 = vld [vmem:[%s1040 + $0x14] sm:$0xf]
    %v1047 = vld [vmem:[%s1040 + $0x18] sm:$0xf]
    %v1048 = vld [vmem:[%s1040 + $0x1c] sm:$0xf]
    %v1049 = vld [vmem:[%s1040 + $0x20] sm:$0xf]
    %v1050 = vld [vmem:[%s1040 + $0x24] sm:$0xf]
    %v1051 = vld [vmem:[%s1040 + $0x28] sm:$0xf]
    %v1052 = vld [vmem:[%s1040 + $0x2c] sm:$0xf]
    %v1053 = vld [vmem:[%s1040 + $0x30] sm:$0xf]
    %v1054 = vld [vmem:[%s1040 + $0x34] sm:$0xf]
    %v1055 = vld [vmem:[%s1040 + $0x38] sm:$0xf]
    %v1056 = vld [vmem:[%s1040 + $0x3c] sm:$0xf]
    %v1057 = vld [vmem:[%s3 + $0x5] sm:$0x1]
    %v1058 = vlaneseq
    %v1059 = vshrl.u32 %v1058, 7
    %v1060 = vsub.s32 0, %v1059
    %v1061 = vrot.slane %v1057, %v1060
    %v1078 = vunpack.c.l.b16 %v1041
    %v1079 = vunpack.c.l.b16 %v1042
    %v1080 = vunpack.c.l.b16 %v1043
    %v1081 = vunpack.c.l.b16 %v1044
    %v1082 = vunpack.c.l.b16 %v1045
    %v1083 = vunpack.c.l.b16 %v1046
    %v1084 = vunpack.c.l.b16 %v1047
    %v1085 = vunpack.c.l.b16 %v1048
    %v1086 = vunpack.c.l.b16 %v1049
    %v1087 = vunpack.c.l.b16 %v1050
    %v1088 = vunpack.c.l.b16 %v1051
    %v1089 = vunpack.c.l.b16 %v1052
    %v1090 = vunpack.c.l.b16 %v1053
    %v1091 = vunpack.c.l.b16 %v1054
    %v1092 = vunpack.c.l.b16 %v1055
    %v1093 = vunpack.c.l.b16 %v1056
    %v1094 = vpack.c.b16 %v1079, %v1078
    %v1095 = vpack.c.b16 %v1081, %v1080
    %v1096 = vpack.c.b16 %v1083, %v1082
    %v1097 = vpack.c.b16 %v1085, %v1084
    %v1098 = vpack.c.b16 %v1087, %v1086
    %v1099 = vpack.c.b16 %v1089, %v1088
    %v1100 = vpack.c.b16 %v1091, %v1090
    %v1101 = vpack.c.b16 %v1093, %v1092
    %1110 = vmatprep.subr.bf16.mxu0 0
    %1111 = vmatpush1.bf16.msra.mxu0 %v1094
    %1112 = vmatprep.subr.bf16.mxu0 0
    %1113 = vmatpush1.bf16.msra.mxu0 %v1095
    %1114 = vmatprep.subr.bf16.mxu0 0
    %1115 = vmatpush1.bf16.msra.mxu0 %v1096
    %1116 = vmatprep.subr.bf16.mxu0 0
    %1117 = vmatpush1.bf16.msra.mxu0 %v1097
    %1118 = vmatprep.subr.bf16.mxu0 0
    %1119 = vmatpush1.bf16.msra.mxu0 %v1098
    %1120 = vmatprep.subr.bf16.mxu0 0
    %1121 = vmatpush1.bf16.msra.mxu0 %v1099
    %1122 = vmatprep.subr.bf16.mxu0 0
    %1123 = vmatpush1.bf16.msra.mxu0 %v1100
    %1124 = vmatprep.subr.bf16.mxu0 0
    %1125 = vmatpush1.bf16.msra.mxu0 %v1101
    %1126 = vmatprep.subr.bf16.mxu0 0
    %1127 = vmatpush1.bf16.msra.mxu0 0
    %1128 = vmatprep.subr.bf16.mxu0 0
    %1129 = vmatpush1.bf16.msra.mxu0 0
    %1130 = vmatprep.subr.bf16.mxu0 0
    %1131 = vmatpush1.bf16.msra.mxu0 0
    %1132 = vmatprep.subr.bf16.mxu0 0
    %1133 = vmatpush1.bf16.msra.mxu0 0
    %1134 = vmatprep.subr.bf16.mxu0 0
    %1135 = vmatpush1.bf16.msra.mxu0 0
    %1136 = vmatprep.subr.bf16.mxu0 0
    %1137 = vmatpush1.bf16.msra.mxu0 0
    %1138 = vmatprep.subr.bf16.mxu0 0
    %1139 = vmatpush1.bf16.msra.mxu0 0
    %1140 = vmatprep.subr.bf16.mxu0 0
    %1141 = vmatpush1.bf16.msra.mxu0 0
    %1142 = vmatprep.mubr.bf16.mxu0 0
    %1143 = vmatmul.mubr.bf16.gmra.mrb[0].mxu0 %v1039
    %v1144 = vpop.f32.mrb[0].mxu0
    %v1145 = vadd.f32 %v1061, %v1144
    %v1146 = vpop.f32.mrb[0].mxu0
    %v1147 = vpop.f32.mrb[0].mxu0
    %v1148 = vpop.f32.mrb[0].mxu0
    %1149 = vdwg.mxu0
    %1150 = vst [vmem:[#allocation8] sm:$0xff] %v1145
    // Predicated region
    $region30: #{tpu_custom_call.1} parent=1 // pred_check
      _
    $region31: #{tpu_custom_call.1} parent=1 // pred_check_branch
      %1152 = sbr.rel (0) target = $region33
    $region32: #{tpu_custom_call.1} parent=1 // pred_region
      %s1154 = ssub.s32 128, 128
      %1155 = vsyncadd [#allocation4], %s1154
      %s1157 = sshll.u32 [#allocation8], 4
      %s1158 = int_to_ptr.vmem [resolvable:$true] %s1157
      %1160 = dma.vmem_to_hbm [thread:$0]  %s1158, 128, %s4, [#allocation4]
    $region33: #{tpu_custom_call.1} parent=1 // pred_fallthru
      _
    // Predicated region
    $region34: #{tpu_custom_call.1} parent=1 // pred_check
      _
    $region35: #{tpu_custom_call.1} parent=1 // pred_check_branch
      %1162 = sbr.rel (0) target = $region37
    $region36: #{tpu_custom_call.1} parent=1 // pred_region
      %1163 = dma.done [#allocation4], 128
    $region37: #{tpu_custom_call.1} parent=1 // pred_fallthru
      _
    %1164 = vsyncpa [#allocation3], 1
    %1165 = vsyncpa [#allocation6], 1
    %1166 = vsyncpa [#allocation4], 1

</llo_original>
